<compile_context>
chip_gen: v7x
topology: tpu7x:2x2x1
jax: 0.10.0
libtpu: 0.0.40
codegen_flags: <defaults>
</compile_context>

<pallas_src>
import functools

import jax
import jax.numpy as jnp
from jax.experimental import pallas as pl
from jax.experimental.pallas import tpu as pltpu

# Decoder constants (from the module __init__)
TARGET_MEAN = (0.008, 0.001, 0.202, 0.2, 0.43, 1.368)
TARGET_STD = (0.866, 0.5, 0.954, 0.668, 0.09, 0.111)
GRID_SIZE = 0.4


def _decoder_kernel(x_ref, out_ref, *, l1, w1):
    # x_ref:   (1, 6, tile_h, W_pad) VMEM
    # out_ref: (1, 8, tile_h, W_pad) VMEM
    tile_h, w_dim = x_ref.shape[2], x_ref.shape[3]

    # In-kernel coordinate grid (no xx/yy DMA). Absolute row offset of this tile.
    # int32 iota + convert is the known-clean lowering path; the two converts are
    # negligible for an HBM-bound kernel.
    row0 = (pl.program_id(1) * tile_h).astype(jnp.float32)
    rows = jax.lax.broadcasted_iota(jnp.int32, (tile_h, w_dim), 0).astype(jnp.float32)
    cols = jax.lax.broadcasted_iota(jnp.int32, (tile_h, w_dim), 1).astype(jnp.float32)

    # De-normalize the angle channels.
    cos_t = x_ref[0, 0, :, :] * TARGET_STD[0] + TARGET_MEAN[0]
    sin_t = x_ref[0, 1, :, :] * TARGET_STD[1] + TARGET_MEAN[1]

    # Box centres, with the dx/dy means folded into the grid-origin constants.
    centre_x = (w1 + TARGET_MEAN[2]) + GRID_SIZE * cols \
               + TARGET_STD[2] * x_ref[0, 2, :, :]
    centre_y = (l1 + TARGET_MEAN[3] + GRID_SIZE * row0) + GRID_SIZE * rows \
               + TARGET_STD[3] * x_ref[0, 3, :, :]

    half_w = 0.5 * jnp.exp(x_ref[0, 4, :, :] * TARGET_STD[4] + TARGET_MEAN[4])
    half_l = 0.5 * jnp.exp(x_ref[0, 5, :, :] * TARGET_STD[5] + TARGET_MEAN[5])

    # cos(atan2(s, c)) = c / sqrt(c^2 + s^2), sin(atan2(s, c)) = s / sqrt(c^2 + s^2),
    # with torch's atan2(0, 0) = 0 convention handled explicitly (EUP rsqrt, no atan2).
    norm_sq = cos_t * cos_t + sin_t * sin_t
    is_zero = norm_sq == 0.0
    inv_norm = jax.lax.rsqrt(jnp.where(is_zero, 1.0, norm_sq))
    cos_n = jnp.where(is_zero, 1.0, cos_t * inv_norm)
    sin_n = jnp.where(is_zero, 0.0, sin_t * inv_norm)

    lc = half_l * cos_n
    ls = half_l * sin_n
    wc = half_w * cos_n
    ws = half_w * sin_n
    two_lc = lc + lc
    two_ls = ls + ls
    two_wc = wc + wc
    two_ws = ws + ws

    # Compute rear_left, derive the other corners incrementally (fewer live temps).
    rl_x = centre_x - lc - ws
    rl_y = centre_y - ls + wc
    fl_x = rl_x + two_lc
    fl_y = rl_y + two_ls

    out_ref[0, 0, :, :] = rl_x             # rear_left_x
    out_ref[0, 1, :, :] = rl_y             # rear_left_y
    out_ref[0, 2, :, :] = rl_x + two_ws    # rear_right_x
    out_ref[0, 3, :, :] = rl_y - two_wc    # rear_right_y
    out_ref[0, 4, :, :] = fl_x + two_ws    # front_right_x
    out_ref[0, 5, :, :] = fl_y - two_wc    # front_right_y
    out_ref[0, 6, :, :] = fl_x             # front_left_x
    out_ref[0, 7, :, :] = fl_y             # front_left_y


def _choose_tile_h(B, H, W_pad, budget_bytes=16 * 1024 * 1024):
    """Row-tile size.

    Prefers a full-H block per batch element (one contiguous DMA per channel);
    otherwise picks the largest 8-aligned tile whose double-buffered I/O plus live
    temporaries fit ~16 MiB, with a 64-row floor (small tiles only reach ~30-60% of
    the HBM roofline).  Also guarantees >=2 grid steps so both v7x TensorCores work.
    """
    # per row: 2*(6 in + 8 out) double-buffered fp32 planes + ~12 live fp32 temps
    bytes_per_row = (2 * (6 + 8) + 12) * W_pad * 4
    t = int(budget_bytes // bytes_per_row)
    if t >= H:
        tile_h = H                                 # full-H block, no divisibility constraint
    else:
        tile_h = max(min(H, 64), (t // 8) * 8)     # >=64-row floor, 8-aligned (v5e-friendly cap
                                                   # comes from the 16 MiB budget itself)
    if B * pl.cdiv(H, tile_h) < 2 and H >= 16:
        tile_h = ((H + 1) // 2 + 7) // 8 * 8       # split rows so the 2nd TC gets a block
    return tile_h


@functools.partial(jax.jit, static_argnames=("geom", "tile_h"))
def decoder_forward(x, geom, tile_h=None):
    """x: (B, 6, H, W) float32 NCHW. geom: (L1, L2, W1, W2). Returns (B, 8, H, W) f32."""
    B, C, H, W = x.shape
    assert C == 6
    L1, L2, W1, W2 = (float(g) for g in geom)

    # Lane-dense output for general geometries: pad W to a multiple of 128 so all 8
    # output planes use unmasked vector stores; padded columns are sliced off below.
    W_pad = ((W + 127) // 128) * 128
    xp = x if W_pad == W else jnp.pad(x, ((0, 0), (0, 0), (0, 0), (0, W_pad - W)))

    if tile_h is None:
        tile_h = _choose_tile_h(B, H, W_pad)
    tile_h = min(int(tile_h), H)
    if tile_h < H:
        tile_h = max(8, (tile_h // 8) * 8)
    n_h = pl.cdiv(H, tile_h)

    # Right-sized scoped VMEM: double-buffered in/out blocks + temporaries + margin,
    # capped at 32 MiB (safe fraction of v7x's 64 MiB physical VMEM).
    io_bytes = 2 * (6 + 8) * tile_h * W_pad * 4
    tmp_bytes = 12 * tile_h * W_pad * 4
    vmem_limit = int(min(max(io_bytes + tmp_bytes + (4 << 20), 8 << 20), 32 << 20))

    kernel = functools.partial(_decoder_kernel, l1=L1, w1=W1)

    out = pl.pallas_call(
        kernel,
        out_shape=jax.ShapeDtypeStruct((B, 8, H, W_pad), jnp.float32),
        grid_spec=pltpu.PrefetchScalarGridSpec(
            num_scalar_prefetch=0,
            grid=(B, n_h),
            in_specs=[
                # NOTE: if xprof shows exposed input DMA, add
                # pipeline_mode=pl.Buffered(3) to this spec only.
                pl.BlockSpec((1, 6, tile_h, W_pad), lambda b, h: (b, 0, h, 0)),
            ],
            out_specs=pl.BlockSpec((1, 8, tile_h, W_pad), lambda b, h: (b, 0, h, 0)),
        ),
        compiler_params=pltpu.CompilerParams(
            dimension_semantics=("parallel", "parallel"),
            vmem_limit_bytes=vmem_limit,
        ),
    )(xp)

    if W_pad != W:
        out = out[:, :, :, :W]
    return out


def decoder_reference(x, geom):
    """Pure-JAX reference mirroring the PyTorch forward."""
    L1, L2, W1, W2 = (float(g) for g in geom)
    B, C, H, W = x.shape
    mean = jnp.asarray(TARGET_MEAN, jnp.float32).reshape(1, 6, 1, 1)
    std = jnp.asarray(TARGET_STD, jnp.float32).reshape(1, 6, 1, 1)
    x = x * std + mean
    cos_t, sin_t, dx, dy, log_w, log_l = jnp.split(x, 6, axis=1)
    theta = jnp.arctan2(sin_t, cos_t)
    cos_t = jnp.cos(theta)
    sin_t = jnp.sin(theta)
    # Index-based grid: torch.arange(start, stop, step)[i] == start + i*step.
    gx = jnp.arange(W, dtype=jnp.float32) * GRID_SIZE + W1
    gy = jnp.arange(H, dtype=jnp.float32) * GRID_SIZE + L1
    yy, xx = jnp.meshgrid(gy, gx, indexing="ij")
    centre_y = yy + dy
    centre_x = xx + dx
    l = jnp.exp(log_l)
    w = jnp.exp(log_w)
    rl_x = centre_x - l / 2 * cos_t - w / 2 * sin_t
    rl_y = centre_y - l / 2 * sin_t + w / 2 * cos_t
    rr_x = centre_x - l / 2 * cos_t + w / 2 * sin_t
    rr_y = centre_y - l / 2 * sin_t - w / 2 * cos_t
    fr_x = centre_x + l / 2 * cos_t + w / 2 * sin_t
    fr_y = centre_y + l / 2 * sin_t - w / 2 * cos_t
    fl_x = centre_x + l / 2 * cos_t - w / 2 * sin_t
    fl_y = centre_y + l / 2 * sin_t + w / 2 * cos_t
    return jnp.concatenate(
        [rl_x, rl_y, rr_x, rr_y, fr_x, fr_y, fl_x, fl_y], axis=1)


if __name__ == "__main__":
    # Small geometry with a non-128-multiple width to exercise the lane-dense padding
    # path: H = (L2-L1)/0.4 = 24, W = (W2-W1)/0.4 = 110 (padded to 128 inside).
    geom = (-4.8, 4.8, 0.0, 44.0)   # (L1, L2, W1, W2)
    B = 2
    H = int(round((geom[1] - geom[0]) / GRID_SIZE))
    W = int(round((geom[3] - geom[2]) / GRID_SIZE))

    key = jax.random.PRNGKey(0)
    x = jax.random.normal(key, (B, 6, H, W), dtype=jnp.float32)

    # Default tiling: full-H blocks, grid=(B, 1) -> 2 parallel steps.
    out = decoder_forward(x, geom)
    out = jax.block_until_ready(out)

    ref = decoder_reference(x, geom)
    assert out.shape == (B, 8, H, W), out.shape
    err = float(jnp.max(jnp.abs(out - ref)))
    assert err < 1e-4, err

    print("KERNEL_OK")
</pallas_src>

<mosaic_0001>
module attributes {stable_mosaic.version = 11 : i64} {
  func.func @_decoder_kernel(%arg0: i32, %arg1: i32, %arg2: memref<1x6x24x128xf32, #tpu.memory_space<vmem>>, %arg3: memref<1x8x24x128xf32, #tpu.memory_space<vmem>>) attributes {dimension_semantics = [#tpu.dimension_semantics<parallel>, #tpu.dimension_semantics<parallel>], iteration_bounds = array<i64: 2, 1>, scalar_prefetch = 0 : i64, scratch_operands = 0 : i64, tpu.core_type = #tpu.core_type<tc>, window_params = [{transform_indices = @transform_0, window_bounds = array<i64: 1, 6, 24, 128>}, {transform_indices = @transform_1, window_bounds = array<i64: 1, 8, 24, 128>}]} {
    %c24_i32 = arith.constant 24 : i32
    %0 = arith.muli %arg1, %c24_i32 : i32
    %1 = arith.sitofp %0 : i32 to f32
    %2 = tpu.iota {dimensions = array<i32: 0>} : vector<24x128xi32>
    %3 = arith.sitofp %2 : vector<24x128xi32> to vector<24x128xf32>
    %4 = tpu.iota {dimensions = array<i32: 1>} : vector<24x128xi32>
    %5 = arith.sitofp %4 : vector<24x128xi32> to vector<24x128xf32>
    %c0 = arith.constant 0 : index
    %c0_0 = arith.constant 0 : index
    %c0_1 = arith.constant 0 : index
    %c0_2 = arith.constant 0 : index
    %6 = vector.load %arg2[%c0, %c0_0, %c0_1, %c0_2] : memref<1x6x24x128xf32, #tpu.memory_space<vmem>>, vector<1x1x24x128xf32>
    %7 = vector.shape_cast %6 : vector<1x1x24x128xf32> to vector<24x128xf32>
    %cst = arith.constant 0.865999996 : f32
    %8 = vector.broadcast %cst : f32 to vector<24x128xf32>
    %9 = arith.mulf %7, %8 : vector<24x128xf32>
    %cst_3 = arith.constant 8.000000e-03 : f32
    %10 = vector.broadcast %cst_3 : f32 to vector<24x128xf32>
    %11 = arith.addf %9, %10 : vector<24x128xf32>
    %c0_4 = arith.constant 0 : index
    %c1 = arith.constant 1 : index
    %c0_5 = arith.constant 0 : index
    %c0_6 = arith.constant 0 : index
    %12 = vector.load %arg2[%c0_4, %c1, %c0_5, %c0_6] : memref<1x6x24x128xf32, #tpu.memory_space<vmem>>, vector<1x1x24x128xf32>
    %13 = vector.shape_cast %12 : vector<1x1x24x128xf32> to vector<24x128xf32>
    %cst_7 = arith.constant 5.000000e-01 : f32
    %14 = vector.broadcast %cst_7 : f32 to vector<24x128xf32>
    %15 = arith.mulf %13, %14 : vector<24x128xf32>
    %cst_8 = arith.constant 1.000000e-03 : f32
    %16 = vector.broadcast %cst_8 : f32 to vector<24x128xf32>
    %17 = arith.addf %15, %16 : vector<24x128xf32>
    %cst_9 = arith.constant 4.000000e-01 : f32
    %18 = vector.broadcast %cst_9 : f32 to vector<24x128xf32>
    %19 = arith.mulf %18, %5 : vector<24x128xf32>
    %cst_10 = arith.constant 2.020000e-01 : f32
    %20 = vector.broadcast %cst_10 : f32 to vector<24x128xf32>
    %21 = arith.addf %20, %19 : vector<24x128xf32>
    %c0_11 = arith.constant 0 : index
    %c2 = arith.constant 2 : index
    %c0_12 = arith.constant 0 : index
    %c0_13 = arith.constant 0 : index
    %22 = vector.load %arg2[%c0_11, %c2, %c0_12, %c0_13] : memref<1x6x24x128xf32, #tpu.memory_space<vmem>>, vector<1x1x24x128xf32>
    %23 = vector.shape_cast %22 : vector<1x1x24x128xf32> to vector<24x128xf32>
    %cst_14 = arith.constant 0.953999996 : f32
    %24 = vector.broadcast %cst_14 : f32 to vector<24x128xf32>
    %25 = arith.mulf %24, %23 : vector<24x128xf32>
    %26 = arith.addf %21, %25 : vector<24x128xf32>
    %cst_15 = arith.constant 4.000000e-01 : f32
    %27 = arith.mulf %cst_15, %1 : f32
    %cst_16 = arith.constant -4.600000e+00 : f32
    %28 = arith.addf %cst_16, %27 : f32
    %cst_17 = arith.constant 4.000000e-01 : f32
    %29 = vector.broadcast %cst_17 : f32 to vector<24x128xf32>
    %30 = arith.mulf %29, %3 : vector<24x128xf32>
    %31 = vector.broadcast %28 : f32 to vector<24x128xf32>
    %32 = arith.addf %31, %30 : vector<24x128xf32>
    %c0_18 = arith.constant 0 : index
    %c3 = arith.constant 3 : index
    %c0_19 = arith.constant 0 : index
    %c0_20 = arith.constant 0 : index
    %33 = vector.load %arg2[%c0_18, %c3, %c0_19, %c0_20] : memref<1x6x24x128xf32, #tpu.memory_space<vmem>>, vector<1x1x24x128xf32>
    %34 = vector.shape_cast %33 : vector<1x1x24x128xf32> to vector<24x128xf32>
    %cst_21 = arith.constant 6.680000e-01 : f32
    %35 = vector.broadcast %cst_21 : f32 to vector<24x128xf32>
    %36 = arith.mulf %35, %34 : vector<24x128xf32>
    %37 = arith.addf %32, %36 : vector<24x128xf32>
    %c0_22 = arith.constant 0 : index
    %c4 = arith.constant 4 : index
    %c0_23 = arith.constant 0 : index
    %c0_24 = arith.constant 0 : index
    %38 = vector.load %arg2[%c0_22, %c4, %c0_23, %c0_24] : memref<1x6x24x128xf32, #tpu.memory_space<vmem>>, vector<1x1x24x128xf32>
    %39 = vector.shape_cast %38 : vector<1x1x24x128xf32> to vector<24x128xf32>
    %cst_25 = arith.constant 9.000000e-02 : f32
    %40 = vector.broadcast %cst_25 : f32 to vector<24x128xf32>
    %41 = arith.mulf %39, %40 : vector<24x128xf32>
    %cst_26 = arith.constant 4.300000e-01 : f32
    %42 = vector.broadcast %cst_26 : f32 to vector<24x128xf32>
    %43 = arith.addf %41, %42 : vector<24x128xf32>
    %44 = math.exp %43 : vector<24x128xf32>
    %cst_27 = arith.constant 5.000000e-01 : f32
    %45 = vector.broadcast %cst_27 : f32 to vector<24x128xf32>
    %46 = arith.mulf %45, %44 : vector<24x128xf32>
    %c0_28 = arith.constant 0 : index
    %c5 = arith.constant 5 : index
    %c0_29 = arith.constant 0 : index
    %c0_30 = arith.constant 0 : index
    %47 = vector.load %arg2[%c0_28, %c5, %c0_29, %c0_30] : memref<1x6x24x128xf32, #tpu.memory_space<vmem>>, vector<1x1x24x128xf32>
    %48 = vector.shape_cast %47 : vector<1x1x24x128xf32> to vector<24x128xf32>
    %cst_31 = arith.constant 1.110000e-01 : f32
    %49 = vector.broadcast %cst_31 : f32 to vector<24x128xf32>
    %50 = arith.mulf %48, %49 : vector<24x128xf32>
    %cst_32 = arith.constant 1.368000e+00 : f32
    %51 = vector.broadcast %cst_32 : f32 to vector<24x128xf32>
    %52 = arith.addf %50, %51 : vector<24x128xf32>
    %53 = math.exp %52 : vector<24x128xf32>
    %cst_33 = arith.constant 5.000000e-01 : f32
    %54 = vector.broadcast %cst_33 : f32 to vector<24x128xf32>
    %55 = arith.mulf %54, %53 : vector<24x128xf32>
    %56 = arith.mulf %11, %11 : vector<24x128xf32>
    %57 = arith.mulf %17, %17 : vector<24x128xf32>
    %58 = arith.addf %56, %57 : vector<24x128xf32>
    %cst_34 = arith.constant 0.000000e+00 : f32
    %59 = vector.broadcast %cst_34 : f32 to vector<24x128xf32>
    %60 = arith.cmpf oeq, %58, %59 : vector<24x128xf32>
    %cst_35 = arith.constant 1.000000e+00 : f32
    %61 = vector.broadcast %cst_35 : f32 to vector<24x128xf32>
    %62 = arith.select %60, %61, %58 : vector<24x128xi1>, vector<24x128xf32>
    %63 = math.rsqrt %62 : vector<24x128xf32>
    %64 = arith.mulf %11, %63 : vector<24x128xf32>
    %cst_36 = arith.constant 1.000000e+00 : f32
    %65 = vector.broadcast %cst_36 : f32 to vector<24x128xf32>
    %66 = arith.select %60, %65, %64 : vector<24x128xi1>, vector<24x128xf32>
    %67 = arith.mulf %17, %63 : vector<24x128xf32>
    %cst_37 = arith.constant 0.000000e+00 : f32
    %68 = vector.broadcast %cst_37 : f32 to vector<24x128xf32>
    %69 = arith.select %60, %68, %67 : vector<24x128xi1>, vector<24x128xf32>
    %70 = arith.mulf %55, %66 : vector<24x128xf32>
    %71 = arith.mulf %55, %69 : vector<24x128xf32>
    %72 = arith.mulf %46, %66 : vector<24x128xf32>
    %73 = arith.mulf %46, %69 : vector<24x128xf32>
    %74 = arith.addf %70, %70 : vector<24x128xf32>
    %75 = arith.addf %71, %71 : vector<24x128xf32>
    %76 = arith.addf %72, %72 : vector<24x128xf32>
    %77 = arith.addf %73, %73 : vector<24x128xf32>
    %78 = arith.subf %26, %70 : vector<24x128xf32>
    %79 = arith.subf %78, %73 : vector<24x128xf32>
    %80 = arith.subf %37, %71 : vector<24x128xf32>
    %81 = arith.addf %80, %72 : vector<24x128xf32>
    %82 = arith.addf %79, %74 : vector<24x128xf32>
    %83 = arith.addf %81, %75 : vector<24x128xf32>
    %c0_38 = arith.constant 0 : index
    %c0_39 = arith.constant 0 : index
    %c0_40 = arith.constant 0 : index
    %c0_41 = arith.constant 0 : index
    %84 = vector.load %arg3[%c0_38, %c0_39, %c0_40, %c0_41] : memref<1x8x24x128xf32, #tpu.memory_space<vmem>>, vector<1x1x24x128xf32>
    %85 = vector.shape_cast %84 : vector<1x1x24x128xf32> to vector<24x128xf32>
    %86 = vector.shape_cast %79 : vector<24x128xf32> to vector<1x1x24x128xf32>
    tpu.vector_store %arg3[%c0_38, %c0_39, %c0_40, %c0_41], %86 {strides = array<i32>} : memref<1x8x24x128xf32, #tpu.memory_space<vmem>>, vector<1x1x24x128xf32>,
    %c0_42 = arith.constant 0 : index
    %c1_43 = arith.constant 1 : index
    %c0_44 = arith.constant 0 : index
    %c0_45 = arith.constant 0 : index
    %87 = vector.load %arg3[%c0_42, %c1_43, %c0_44, %c0_45] : memref<1x8x24x128xf32, #tpu.memory_space<vmem>>, vector<1x1x24x128xf32>
    %88 = vector.shape_cast %87 : vector<1x1x24x128xf32> to vector<24x128xf32>
    %89 = vector.shape_cast %81 : vector<24x128xf32> to vector<1x1x24x128xf32>
    tpu.vector_store %arg3[%c0_42, %c1_43, %c0_44, %c0_45], %89 {strides = array<i32>} : memref<1x8x24x128xf32, #tpu.memory_space<vmem>>, vector<1x1x24x128xf32>,
    %90 = arith.addf %79, %77 : vector<24x128xf32>
    %c0_46 = arith.constant 0 : index
    %c2_47 = arith.constant 2 : index
    %c0_48 = arith.constant 0 : index
    %c0_49 = arith.constant 0 : index
    %91 = vector.load %arg3[%c0_46, %c2_47, %c0_48, %c0_49] : memref<1x8x24x128xf32, #tpu.memory_space<vmem>>, vector<1x1x24x128xf32>
    %92 = vector.shape_cast %91 : vector<1x1x24x128xf32> to vector<24x128xf32>
    %93 = vector.shape_cast %90 : vector<24x128xf32> to vector<1x1x24x128xf32>
    tpu.vector_store %arg3[%c0_46, %c2_47, %c0_48, %c0_49], %93 {strides = array<i32>} : memref<1x8x24x128xf32, #tpu.memory_space<vmem>>, vector<1x1x24x128xf32>,
    %94 = arith.subf %81, %76 : vector<24x128xf32>
    %c0_50 = arith.constant 0 : index
    %c3_51 = arith.constant 3 : index
    %c0_52 = arith.constant 0 : index
    %c0_53 = arith.constant 0 : index
    %95 = vector.load %arg3[%c0_50, %c3_51, %c0_52, %c0_53] : memref<1x8x24x128xf32, #tpu.memory_space<vmem>>, vector<1x1x24x128xf32>
    %96 = vector.shape_cast %95 : vector<1x1x24x128xf32> to vector<24x128xf32>
    %97 = vector.shape_cast %94 : vector<24x128xf32> to vector<1x1x24x128xf32>
    tpu.vector_store %arg3[%c0_50, %c3_51, %c0_52, %c0_53], %97 {strides = array<i32>} : memref<1x8x24x128xf32, #tpu.memory_space<vmem>>, vector<1x1x24x128xf32>,
    %98 = arith.addf %82, %77 : vector<24x128xf32>
    %c0_54 = arith.constant 0 : index
    %c4_55 = arith.constant 4 : index
    %c0_56 = arith.constant 0 : index
    %c0_57 = arith.constant 0 : index
    %99 = vector.load %arg3[%c0_54, %c4_55, %c0_56, %c0_57] : memref<1x8x24x128xf32, #tpu.memory_space<vmem>>, vector<1x1x24x128xf32>
    %100 = vector.shape_cast %99 : vector<1x1x24x128xf32> to vector<24x128xf32>
    %101 = vector.shape_cast %98 : vector<24x128xf32> to vector<1x1x24x128xf32>
    tpu.vector_store %arg3[%c0_54, %c4_55, %c0_56, %c0_57], %101 {strides = array<i32>} : memref<1x8x24x128xf32, #tpu.memory_space<vmem>>, vector<1x1x24x128xf32>,
    %102 = arith.subf %83, %76 : vector<24x128xf32>
    %c0_58 = arith.constant 0 : index
    %c5_59 = arith.constant 5 : index
    %c0_60 = arith.constant 0 : index
    %c0_61 = arith.constant 0 : index
    %103 = vector.load %arg3[%c0_58, %c5_59, %c0_60, %c0_61] : memref<1x8x24x128xf32, #tpu.memory_space<vmem>>, vector<1x1x24x128xf32>
    %104 = vector.shape_cast %103 : vector<1x1x24x128xf32> to vector<24x128xf32>
    %105 = vector.shape_cast %102 : vector<24x128xf32> to vector<1x1x24x128xf32>
    tpu.vector_store %arg3[%c0_58, %c5_59, %c0_60, %c0_61], %105 {strides = array<i32>} : memref<1x8x24x128xf32, #tpu.memory_space<vmem>>, vector<1x1x24x128xf32>,
    %c0_62 = arith.constant 0 : index
    %c6 = arith.constant 6 : index
    %c0_63 = arith.constant 0 : index
    %c0_64 = arith.constant 0 : index
    %106 = vector.load %arg3[%c0_62, %c6, %c0_63, %c0_64] : memref<1x8x24x128xf32, #tpu.memory_space<vmem>>, vector<1x1x24x128xf32>
    %107 = vector.shape_cast %106 : vector<1x1x24x128xf32> to vector<24x128xf32>
    %108 = vector.shape_cast %82 : vector<24x128xf32> to vector<1x1x24x128xf32>
    tpu.vector_store %arg3[%c0_62, %c6, %c0_63, %c0_64], %108 {strides = array<i32>} : memref<1x8x24x128xf32, #tpu.memory_space<vmem>>, vector<1x1x24x128xf32>,
    %c0_65 = arith.constant 0 : index
    %c7 = arith.constant 7 : index
    %c0_66 = arith.constant 0 : index
    %c0_67 = arith.constant 0 : index
    %109 = vector.load %arg3[%c0_65, %c7, %c0_66, %c0_67] : memref<1x8x24x128xf32, #tpu.memory_space<vmem>>, vector<1x1x24x128xf32>
    %110 = vector.shape_cast %109 : vector<1x1x24x128xf32> to vector<24x128xf32>
    %111 = vector.shape_cast %83 : vector<24x128xf32> to vector<1x1x24x128xf32>
    tpu.vector_store %arg3[%c0_65, %c7, %c0_66, %c0_67], %111 {strides = array<i32>} : memref<1x8x24x128xf32, #tpu.memory_space<vmem>>, vector<1x1x24x128xf32>,
    return
  }
  func.func @transform_0(%arg0: i32, %arg1: i32) -> (i32, i32, i32, i32) {
    %c0_i32 = arith.constant 0 : i32
    %c0_i32_0 = arith.constant 0 : i32
    %c0_i32_1 = arith.constant 0 : i32
    return %arg0, %c0_i32, %arg1, %c0_i32_0 : i32, i32, i32, i32
  }
  func.func @transform_1(%arg0: i32, %arg1: i32) -> (i32, i32, i32, i32) {
    %c0_i32 = arith.constant 0 : i32
    %c0_i32_0 = arith.constant 0 : i32
    %c0_i32_1 = arith.constant 0 : i32
    return %arg0, %c0_i32, %arg1, %c0_i32_0 : i32, i32, i32, i32
  }
}

</mosaic_0001>

<llo_original>
// kernel: decoder_forward.1
$region0: #{decoder_forward.1}
  #allocation0 [shape = 'u32[]', space=smem, size = 0x4, offset = 0x4, fixed_abs, tag = 'smem constant byte address 0x4 - core index']
  #allocation1 [shape = 'u32[144,128]{1,0:T(1,128)}', space=vmem, size = 0x12000, scoped, tag = 'internal scratch']
  %s0 = inlined_call_operand.vmem [shape: f32[2,6,24,128], index: 0, kind: input, shape index: {}]
  %s1 = inlined_call_operand.hbm [shape: f32[2,8,24,128], index: 1, kind: output, shape index: {}]
  %s2 = sld [smem:[#allocation0]]
  $region37: #{decoder_forward.1} parent=0
    _
  %s4 = ssub.s32 1, %s2
  %s5 = scalar_select 0, %s4, %s2
  $region1: #{decoder_forward.1} parent=0
    #allocation2 [shape = 'u8[196608]{0}', space=vmem, size = 0x30000, scoped, tag = 'output window, operand 0']
    #allocation3 [shape = 's32[2]{0}', space=sflag, size = 0x8, scoped, tag = 'scoped memory for decoder_forward.1']
    %6 = vsyncpa [#allocation3], 0
    %s7 = scalar_lea.sflag [#allocation3], 1
    %8 = vsyncpa %s7, 0
    loop: start=0, step=1, limit=4
    $region2: #{decoder_forward.1} parent=1 // loop_pre_header
      _
    $region3: #{decoder_forward.1} parent=1 // loop_header
      %s10 = sphi 0, %s14
      %p11 = scmp.ge.s32.totalorder %s10, 4
      %s17 = sphi 0, %s29
      %s18 = sphi 0, %s25
      %s19 = sphi 0, %s17
      %s20 = sphi 0, %s18
      %s21 = sphi 0, %s19
      %s22 = sphi 0, %s20
      %s34 = sphi 0, %s36
      %s37 = sphi 0, %s34
      %s38 = sphi 0, %s37
      %s54 = sphi 0, %s38
      %s62 = sphi 0, %s64
      %s65 = sphi 0, %s62
      %s66 = sphi 0, %s65
      %s82 = sphi 0, %s66
    $region4: #{decoder_forward.1} parent=1 // loop_header_branch
      %13 = sbr.rel (%p11) target = $region8
    $region5: #{decoder_forward.1} parent=1 // loop_body
      %s15 = ssub.s32 %s10, 1
      %s16 = ssub.s32 %s10, 2
      %s23 = sadd.s32 1, %s18
      %p24 = scmp.ge.s32.totalorder %s23, 1
      %s25 = scalar_select %p24, 0, %s23
      %s26 = sadd.s32 1, %s17
      %s27 = scalar_select %p24, %s26, %s17
      %p28 = scmp.ge.s32.totalorder %s27, 2
      %s29 = scalar_select %p28, 0, %s27
      %s30 = ssub.s32 %s17, %s29
      %s31 = ssub.s32 %s18, %s25
      %s32 = sor.u32 %s30, %s31
      %p33 = scmp.eq.s32.totalorder %s32, 0
      %s35 = sadd.s32 %s34, 1
      %s36 = scalar_select %p33, %s34, %s35
      %p39 = pneg %p33
      %p40 = scmp.eq.s32.totalorder %s10, 1
      %p41 = por %p39, %p40
      %p42 = scmp.ne.s32.totalorder %s34, %s37
      %p43 = scmp.eq.s32.totalorder %s10, 0
      %p44 = por %p42, %p43
      %p45 = scmp.ne.s32.totalorder %s34, %s37
      %p46 = scmp.eq.s32.totalorder %s15, 1
      %p47 = por %p45, %p46
      %p48 = scmp.ne.s32.totalorder %s37, %s38
      %p49 = scmp.eq.s32.totalorder %s15, 0
      %p50 = por %p48, %p49
      %p51 = scmp.ne.s32.totalorder %s37, %s38
      %p52 = scmp.eq.s32.totalorder %s16, 1
      %p53 = por %p51, %p52
      %p55 = scmp.ne.s32.totalorder %s38, %s54
      %p56 = scmp.eq.s32.totalorder %s16, 0
      %p57 = por %p55, %p56
      %s58 = ssub.s32 %s17, %s29
      %s59 = ssub.s32 %s18, %s25
      %s60 = sor.u32 %s58, %s59
      %p61 = scmp.eq.s32.totalorder %s60, 0
      %s63 = sadd.s32 %s62, 1
      %s64 = scalar_select %p61, %s62, %s63
      %p67 = pneg %p61
      %p68 = scmp.eq.s32.totalorder %s10, 1
      %p69 = por %p67, %p68
      %p70 = scmp.ne.s32.totalorder %s62, %s65
      %p71 = scmp.eq.s32.totalorder %s10, 0
      %p72 = por %p70, %p71
      %p73 = scmp.ne.s32.totalorder %s62, %s65
      %p74 = scmp.eq.s32.totalorder %s15, 1
      %p75 = por %p73, %p74
      %p76 = scmp.ne.s32.totalorder %s65, %s66
      %p77 = scmp.eq.s32.totalorder %s15, 0
      %p78 = por %p76, %p77
      %p79 = scmp.ne.s32.totalorder %s65, %s66
      %p80 = scmp.eq.s32.totalorder %s16, 1
      %p81 = por %p79, %p80
      %p83 = scmp.ne.s32.totalorder %s66, %s82
      %p84 = scmp.eq.s32.totalorder %s16, 0
      %p85 = por %p83, %p84
      %p86 = scmp.le.s32.totalorder 1, %s10
      %p87 = scmp.lt.s32.totalorder %s10, 3
      %p88 = pnand %p86, %p87
      %p89 = pneg %p88
      // Predicated region
      $region9: #{decoder_forward.1} parent=5 // pred_check
        _
      $region10: #{decoder_forward.1} parent=5 // pred_check_branch
        %91 = sbr.rel (%p88) target = $region12
      $region11: #{decoder_forward.1} parent=5 // pred_region
        %s92 = ssub.s32 %s10, 1
      $region12: #{decoder_forward.1} parent=5 // pred_fallthru
        _
      %p93 = scmp.lt.s32.totalorder %s10, 2
      // Predicated region
      $region13: #{decoder_forward.1} parent=5 // pred_check
        %p94 = pneg %p93
      $region14: #{decoder_forward.1} parent=5 // pred_check_branch
        %96 = sbr.rel (%p94) target = $region16
      $region15: #{decoder_forward.1} parent=5 // pred_region
        // Predicated region
        $region17: #{decoder_forward.1} parent=15 // pred_check
          %p97 = pneg %p44
        $region18: #{decoder_forward.1} parent=15 // pred_check_branch
          %99 = sbr.rel (%p97) target = $region20
        $region19: #{decoder_forward.1} parent=15 // pred_region
          %s100 = smul.u32 3, %s18
          %p101 = scmp.lt.s32.totalorder %s17, 1
          %s102 = scalar_select %p101, %s17, 1
          %p103 = scmp.lt.s32.totalorder %s100, 2
          %s104 = scalar_select %p103, %s100, 2
          %s105 = smul.addr %s102, 18
          %s106 = sadd.s32 %s104, %s105
          %s107 = smul.addr %s106, 8
          %s108 = scalar_lea.vmem %s0, %s107
          %s109 = smul.u32 3, %s18
        $region20: #{decoder_forward.1} parent=15 // pred_fallthru
          _
      $region16: #{decoder_forward.1} parent=5 // pred_fallthru
        _
      %p110 = scmp.le.s32.totalorder 1, %s10
      %p111 = scmp.lt.s32.totalorder %s10, 3
      %p112 = pnand %p110, %p111
      %p113 = pneg %p112
      // Predicated region
      $region21: #{decoder_forward.1} parent=5 // pred_check
        _
      $region22: #{decoder_forward.1} parent=5 // pred_check_branch
        %115 = sbr.rel (%p112) target = $region24
      $region23: #{decoder_forward.1} parent=5 // pred_region
        %s116 = ssub.s32 %s10, 1
        %s117 = smul.u32 3, %s20
        %p118 = scmp.lt.s32.totalorder %s19, 1
        %s119 = scalar_select %p118, %s19, 1
        %p120 = scmp.lt.s32.totalorder %s117, 2
        %s121 = scalar_select %p120, %s117, 2
        %s122 = smul.addr %s119, 18
        %s123 = sadd.s32 %s121, %s122
        %s124 = smul.addr %s123, 8
        %s125 = scalar_lea.vmem %s0, %s124
        %p126 = pneg %p50
        %p127 = pneg %p47
        %p128 = pneg %p78
        %p129 = pneg %p75
        %s130 = sand.u32 %s65, 1
        %s131 = scalar_lea.sflag [#allocation3], %s130
        %s132 = sand.u32 %s65, 1
        %s133 = smul.addr %s132, 192
        %s134 = scalar_lea.vmem [#allocation2], %s133
        %s135 = smul.u32 3, %s20
        %p136 = scmp.lt.s32.totalorder %s19, 1
        %s137 = scalar_select %p136, %s19, 1
        %p138 = scmp.lt.s32.totalorder %s135, 2
        %s139 = scalar_select %p138, %s135, 2
        %s140 = smul.addr %s137, 18
        %s141 = sadd.s32 %s139, %s140
        %s142 = smul.addr %s141, 8
        %s143 = scalar_lea.vmem %s0, %s142
        %s144 = smul.u32 3, %s20
        %s145 = smul.u32 3, %s20
        %s146 = smul.u32 %s20, 24
        %s147 = scvt.s32.f32 %s146
        %v148 = vlaneseq
        %v149 = vshrl.u32 %v148, 7
        %v150 = vadd.s32 %v149, 8
        %v151 = vadd.s32 %v149, 16
        %v152 = vcvt.s32.f32 %v149
        %v153 = vcvt.s32.f32 %v150
        %v154 = vcvt.s32.f32 %v151
        %v155 = vlaneseq
        %v156 = vand.u32 %v155, 127
        %v157 = vcvt.s32.f32 %v156
        %v158 = vld [vmem:[%s143] sm:$0xff]
        %v159 = vld [vmem:[%s143 + $0x8] sm:$0xff]
        %v160 = vld [vmem:[%s143 + $0x10] sm:$0xff]
        %v161 = vmul.f32 %v158, 0.866
        %v162 = vmul.f32 %v159, 0.866
        %v163 = vmul.f32 %v160, 0.866
        %v164 = vadd.f32 %v161, 0.008
        %v165 = vadd.f32 %v162, 0.008
        %v166 = vadd.f32 %v163, 0.008
        %s167 = scalar_lea.vmem %s143, 24
        %v168 = vld [vmem:[%s167] sm:$0xff]
        %v169 = vld [vmem:[%s167 + $0x8] sm:$0xff]
        %v170 = vld [vmem:[%s167 + $0x10] sm:$0xff]
        %v171 = vmul.f32 %v168, 0.5
        %v172 = vmul.f32 %v169, 0.5
        %v173 = vmul.f32 %v170, 0.5
        %v174 = vadd.f32 %v171, 0.001
        %v175 = vadd.f32 %v172, 0.001
        %v176 = vadd.f32 %v173, 0.001
        %v177 = vmul.f32 %v157, 0.4
        %v178 = vadd.f32 %v177, 0.202
        %s179 = scalar_lea.vmem %s143, 48
        %v180 = vld [vmem:[%s179] sm:$0xff]
        %v181 = vld [vmem:[%s179 + $0x8] sm:$0xff]
        %v182 = vld [vmem:[%s179 + $0x10] sm:$0xff]
        %v183 = vmul.f32 %v180, 0.954
        %v184 = vmul.f32 %v181, 0.954
        %v185 = vmul.f32 %v182, 0.954
        %v186 = vadd.f32 %v178, %v183
        %v187 = vadd.f32 %v178, %v184
        %v188 = vadd.f32 %v178, %v185
        %s189 = smul.f32 %s147, 0.4
        %s190 = sadd.f32 %s189, -4.6
        %v191 = vmul.f32 %v152, 0.4
        %v192 = vmul.f32 %v153, 0.4
        %v193 = vmul.f32 %v154, 0.4
        %v194 = vstv %s190
        %v195 = vadd.f32 %v194, %v191
        %v196 = vadd.f32 %v194, %v192
        %v197 = vadd.f32 %v194, %v193
        %s198 = scalar_lea.vmem %s143, 72
        %v199 = vld [vmem:[%s198] sm:$0xff]
        %v200 = vld [vmem:[%s198 + $0x8] sm:$0xff]
        %v201 = vld [vmem:[%s198 + $0x10] sm:$0xff]
        %v202 = vmul.f32 %v199, 0.668
        %v203 = vmul.f32 %v200, 0.668
        %v204 = vmul.f32 %v201, 0.668
        %v205 = vadd.f32 %v195, %v202
        %v206 = vadd.f32 %v196, %v203
        %v207 = vadd.f32 %v197, %v204
        %s208 = scalar_lea.vmem %s143, 96
        %v209 = vld [vmem:[%s208] sm:$0xff]
        %v210 = vld [vmem:[%s208 + $0x8] sm:$0xff]
        %v211 = vld [vmem:[%s208 + $0x10] sm:$0xff]
        %v212 = vmul.f32 %v209, 0.09
        %v213 = vmul.f32 %v210, 0.09
        %v214 = vmul.f32 %v211, 0.09
        %v215 = vadd.f32 %v212, 0.43
        %v216 = vadd.f32 %v213, 0.43
        %v217 = vadd.f32 %v214, 0.43
        %v218 = vmul.f32 %v215, 1.442695
        %v219 = vpow.pop %v218
        %v220 = vmul.f32 %v216, 1.442695
        %v221 = vpow.pop %v220
        %v222 = vmul.f32 %v217, 1.442695
        %v223 = vpow.pop %v222
        %v224 = vmul.f32 %v219, 0.5
        %v225 = vmul.f32 %v221, 0.5
        %v226 = vmul.f32 %v223, 0.5
        %s227 = scalar_lea.vmem %s143, 120
        %v228 = vld [vmem:[%s227] sm:$0xff]
        %v229 = vld [vmem:[%s227 + $0x8] sm:$0xff]
        %v230 = vld [vmem:[%s227 + $0x10] sm:$0xff]
        %v231 = vmul.f32 %v228, 0.111
        %v232 = vmul.f32 %v229, 0.111
        %v233 = vmul.f32 %v230, 0.111
        %v234 = vadd.f32 %v231, 1.368
        %v235 = vadd.f32 %v232, 1.368
        %v236 = vadd.f32 %v233, 1.368
        %v237 = vmul.f32 %v234, 1.442695
        %v238 = vpow.pop %v237
        %v239 = vmul.f32 %v235, 1.442695
        %v240 = vpow.pop %v239
        %v241 = vmul.f32 %v236, 1.442695
        %v242 = vpow.pop %v241
        %v243 = vmul.f32 %v238, 0.5
        %v244 = vmul.f32 %v240, 0.5
        %v245 = vmul.f32 %v242, 0.5
        %v246 = vmul.f32 %v164, %v164
        %v247 = vmul.f32 %v165, %v165
        %v248 = vmul.f32 %v166, %v166
        %v249 = vmul.f32 %v174, %v174
        %v250 = vmul.f32 %v175, %v175
        %v251 = vmul.f32 %v176, %v176
        %v252 = vadd.f32 %v246, %v249
        %v253 = vadd.f32 %v247, %v250
        %v254 = vadd.f32 %v248, %v251
        %vm255 = vcmp.eq.f32.partialorder %v252, 0.0
        %vm256 = vcmp.eq.f32.partialorder %v253, 0.0
        %vm257 = vcmp.eq.f32.partialorder %v254, 0.0
        %v258 = vsel %vm255, 1.0, %v252
        %v259 = vsel %vm256, 1.0, %v253
        %v260 = vsel %vm257, 1.0, %v254
        %v261 = vrsqrt.pop %v258
        %v262 = vrsqrt.pop %v259
        %v263 = vrsqrt.pop %v260
        %v264 = vmul.f32 %v164, %v261
        %v265 = vmul.f32 %v165, %v262
        %v266 = vmul.f32 %v166, %v263
        %v267 = vsel %vm255, 1.0, %v264
        %v268 = vsel %vm256, 1.0, %v265
        %v269 = vsel %vm257, 1.0, %v266
        %v270 = vmul.f32 %v174, %v261
        %v271 = vmul.f32 %v175, %v262
        %v272 = vmul.f32 %v176, %v263
        %v273 = vsel %vm255, 0.0, %v270
        %v274 = vsel %vm256, 0.0, %v271
        %v275 = vsel %vm257, 0.0, %v272
        %v276 = vmul.f32 %v243, %v267
        %v277 = vmul.f32 %v244, %v268
        %v278 = vmul.f32 %v245, %v269
        %v279 = vmul.f32 %v243, %v273
        %v280 = vmul.f32 %v244, %v274
        %v281 = vmul.f32 %v245, %v275
        %v282 = vmul.f32 %v224, %v267
        %v283 = vmul.f32 %v225, %v268
        %v284 = vmul.f32 %v226, %v269
        %v285 = vmul.f32 %v224, %v273
        %v286 = vmul.f32 %v225, %v274
        %v287 = vmul.f32 %v226, %v275
        %v288 = vadd.f32 %v276, %v276
        %v289 = vadd.f32 %v277, %v277
        %v290 = vadd.f32 %v278, %v278
        %v291 = vadd.f32 %v279, %v279
        %v292 = vadd.f32 %v280, %v280
        %v293 = vadd.f32 %v281, %v281
        %v294 = vadd.f32 %v282, %v282
        %v295 = vadd.f32 %v283, %v283
        %v296 = vadd.f32 %v284, %v284
        %v297 = vadd.f32 %v285, %v285
        %v298 = vadd.f32 %v286, %v286
        %v299 = vadd.f32 %v287, %v287
        %v300 = vsub.f32 %v186, %v276
        %v301 = vsub.f32 %v187, %v277
        %v302 = vsub.f32 %v188, %v278
        %v303 = vsub.f32 %v300, %v285
        %v304 = vsub.f32 %v301, %v286
        %v305 = vsub.f32 %v302, %v287
        %v306 = vsub.f32 %v205, %v279
        %v307 = vsub.f32 %v206, %v280
        %v308 = vsub.f32 %v207, %v281
        %v309 = vadd.f32 %v306, %v282
        %v310 = vadd.f32 %v307, %v283
        %v311 = vadd.f32 %v308, %v284
        %v312 = vadd.f32 %v303, %v288
        %v313 = vadd.f32 %v304, %v289
        %v314 = vadd.f32 %v305, %v290
        %v315 = vadd.f32 %v309, %v291
        %v316 = vadd.f32 %v310, %v292
        %v317 = vadd.f32 %v311, %v293
        %318 = vst [vmem:[%s134] sm:$0xff] %v303
        %319 = vst [vmem:[%s134 + $0x8] sm:$0xff] %v304
        %320 = vst [vmem:[%s134 + $0x10] sm:$0xff] %v305
        %s321 = scalar_lea.vmem %s134, 24 [#allocation2]
        %322 = vst [vmem:[%s321] sm:$0xff] %v309
        %323 = vst [vmem:[%s321 + $0x8] sm:$0xff] %v310
        %324 = vst [vmem:[%s321 + $0x10] sm:$0xff] %v311
        %v325 = vadd.f32 %v303, %v297
        %v326 = vadd.f32 %v304, %v298
        %v327 = vadd.f32 %v305, %v299
        %s328 = scalar_lea.vmem %s134, 48 [#allocation2]
        %329 = vst [vmem:[%s328] sm:$0xff] %v325
        %330 = vst [vmem:[%s328 + $0x8] sm:$0xff] %v326
        %331 = vst [vmem:[%s328 + $0x10] sm:$0xff] %v327
        %v332 = vsub.f32 %v309, %v294
        %v333 = vsub.f32 %v310, %v295
        %v334 = vsub.f32 %v311, %v296
        %s335 = scalar_lea.vmem %s134, 72 [#allocation2]
        %336 = vst [vmem:[%s335] sm:$0xff] %v332
        %337 = vst [vmem:[%s335 + $0x8] sm:$0xff] %v333
        %338 = vst [vmem:[%s335 + $0x10] sm:$0xff] %v334
        %v339 = vadd.f32 %v312, %v297
        %v340 = vadd.f32 %v313, %v298
        %v341 = vadd.f32 %v314, %v299
        %s342 = scalar_lea.vmem %s134, 96 [#allocation2]
        %343 = vst [vmem:[%s342] sm:$0xff] %v339
        %344 = vst [vmem:[%s342 + $0x8] sm:$0xff] %v340
        %345 = vst [vmem:[%s342 + $0x10] sm:$0xff] %v341
        %v346 = vsub.f32 %v315, %v294
        %v347 = vsub.f32 %v316, %v295
        %v348 = vsub.f32 %v317, %v296
        %s349 = scalar_lea.vmem %s134, 120 [#allocation2]
        %350 = vst [vmem:[%s349] sm:$0xff] %v346
        %351 = vst [vmem:[%s349 + $0x8] sm:$0xff] %v347
        %352 = vst [vmem:[%s349 + $0x10] sm:$0xff] %v348
        %s353 = scalar_lea.vmem %s134, 144 [#allocation2]
        %354 = vst [vmem:[%s353] sm:$0xff] %v312
        %355 = vst [vmem:[%s353 + $0x8] sm:$0xff] %v313
        %356 = vst [vmem:[%s353 + $0x10] sm:$0xff] %v314
        %s357 = scalar_lea.vmem %s134, 168 [#allocation2]
        %358 = vst [vmem:[%s357] sm:$0xff] %v315
        %359 = vst [vmem:[%s357 + $0x8] sm:$0xff] %v316
        %360 = vst [vmem:[%s357 + $0x10] sm:$0xff] %v317
        %s361 = sand.u32 %s65, 1
        %s362 = scalar_lea.sflag [#allocation3], %s361
        %s363 = sand.u32 %s65, 1
        %s364 = smul.addr %s363, 192
        %s365 = scalar_lea.vmem [#allocation2], %s364
        // Predicated region
        $region25: #{decoder_forward.1} parent=23 // pred_check
          %p366 = pneg %p75
        $region26: #{decoder_forward.1} parent=23 // pred_check_branch
          %368 = sbr.rel (%p366) target = $region28
        $region27: #{decoder_forward.1} parent=23 // pred_region
          %s369 = smul.u32 3, %s20
          %s371 = ssub.s32 3072, 3072
          %372 = vsyncadd %s362, %s371
          %s373 = smul.addr %s19, 24
          %s374 = sadd.s32 %s369, %s373
          %s375 = smul.addr %s374, 128
          %s376 = scalar_lea.hbm %s1, %s375
          %s377 = sshll.u32 %s365, 4
          %s378 = int_to_ptr.vmem [resolvable:$true] %s377
          %383 = dma.vmem_to_hbm [thread:$0]  %s378, 3072, %s376, %s362, 128, 128, 8
        $region28: #{decoder_forward.1} parent=23 // pred_fallthru
          _
      $region24: #{decoder_forward.1} parent=5 // pred_fallthru
        _
      %p384 = scmp.le.s32.totalorder 2, %s10
      // Predicated region
      $region29: #{decoder_forward.1} parent=5 // pred_check
        %p385 = pneg %p384
      $region30: #{decoder_forward.1} parent=5 // pred_check_branch
        %387 = sbr.rel (%p385) target = $region32
      $region31: #{decoder_forward.1} parent=5 // pred_region
        %s388 = ssub.s32 %s10, 2
        // Predicated region
        $region33: #{decoder_forward.1} parent=31 // pred_check
          %p389 = pneg %p81
        $region34: #{decoder_forward.1} parent=31 // pred_check_branch
          %391 = sbr.rel (%p389) target = $region36
        $region35: #{decoder_forward.1} parent=31 // pred_region
          %s392 = sand.u32 %s66, 1
          %s393 = scalar_lea.sflag [#allocation3], %s392
          %s394 = sand.u32 %s66, 1
          %s395 = smul.addr %s394, 192
          %s396 = scalar_lea.vmem [#allocation2], %s395
          %397 = dma.done %s393, 3072
        $region36: #{decoder_forward.1} parent=31 // pred_fallthru
          _
      $region32: #{decoder_forward.1} parent=5 // pred_fallthru
        _
    $region6: #{decoder_forward.1} parent=1 // loop_footer
      %s14 = sadd.s32 1, %s10
    $region7: #{decoder_forward.1} parent=1 // loop_footer_branch
      %9 = sbr.rel target = $region3
    $region8: #{decoder_forward.1} parent=1 // loop_exit
      _
    %398 = vsyncpa [#allocation3], 1
    %s399 = scalar_lea.sflag [#allocation3], 1
    %400 = vsyncpa %s399, 1

</llo_original>
